<compile_context>
chip_gen: v5e
topology: v5e:2x2
jax: 0.10.0
libtpu: 0.0.40
codegen_flags: <defaults>
</compile_context>

<pallas_src>
import functools

import jax
import jax.numpy as jnp
from jax import lax
from jax.experimental import pallas as pl
from jax.experimental.pallas import tpu as pltpu

_EPS = 1e-12  # torch.nn.functional.normalize default eps


def _rmsnorm_kernel(x_ref, g_ref, o_ref, *, group, dim):
    # x_ref: (row_tile, group*dim); g_ref: (1, group*dim) gamma pre-scaled by
    # sqrt(dim) and tiled `group` times.  `group` > 1 only for narrow dims
    # (lane-dense packing of several logical rows per 128-lane block row).
    x = x_ref[...].astype(jnp.float32)
    g = g_ref[...].astype(jnp.float32)
    eps2 = jnp.float32(_EPS * _EPS)
    if group == 1:
        sq = jnp.sum(x * x, axis=-1, keepdims=True)             # (rt, 1)
        inv = lax.rsqrt(jnp.maximum(sq, eps2))                   # EUP
        o_ref[...] = (x * inv * g).astype(o_ref.dtype)
    else:
        rt = x.shape[0]
        x3 = x.reshape(rt, group, dim)
        sq = jnp.sum(x3 * x3, axis=-1, keepdims=True)            # (rt, g, 1)
        inv = lax.rsqrt(jnp.maximum(sq, eps2))                    # (rt, g, 1)
        inv_flat = jnp.broadcast_to(inv, (rt, group, dim)).reshape(rt, group * dim)
        o_ref[...] = (x * inv_flat * g).astype(o_ref.dtype)


def _vmem_budget():
    """(f32 block byte budget, vmem_limit_bytes), generation-aware."""
    try:
        cap = pltpu.get_tpu_info().vmem_capacity_bytes
    except Exception:  # pragma: no cover - query unavailable
        cap = 0
    if cap >= (96 << 20):        # v5e / v6e: 128 MiB physical VMEM
        return 8 << 20, 64 << 20
    if cap > 0:                  # v7x: 64 MiB physical VMEM per TensorCore
        return 2 << 20, 32 << 20
    return 4 << 20, 32 << 20     # unknown: conservative


def _choose_row_tile(rows, row_bytes_f32, sublane, target_bytes, min_steps=2):
    """Row tile from an f32 VMEM byte budget, rounded to the sublane multiple.

    The budget is the in-kernel f32 working set (input is upcast), so bf16
    inputs don't silently double the VMEM footprint.  min_steps=2 keeps at
    least two grid steps on inputs that allow it so both v7x TensorCores get
    work and the DMA pipeline stays alive.
    """
    if rows <= sublane:
        return rows  # single block equal to the full array: always legal
    row_tile = max(sublane, (target_bytes // row_bytes_f32) // sublane * sublane)
    rows_aligned = pl.cdiv(rows, sublane) * sublane
    row_tile = min(row_tile, rows_aligned)
    if rows_aligned >= min_steps * sublane:
        row_tile = min(
            row_tile, max(sublane, (rows_aligned // min_steps) // sublane * sublane)
        )
    return row_tile


def rmsnorm_pallas(x, gamma):
    """RMSNorm over the last axis of x.

    x:     (..., dim)
    gamma: (dim,)
    """
    orig_shape = x.shape
    dim = orig_shape[-1]
    scale = float(dim) ** 0.5

    x2d = x.reshape(-1, dim)                                  # (rows, dim)
    rows = x2d.shape[0]

    # Lane-dense repack for narrow feature dims: pack `group` logical rows per
    # 128-lane block row.  Row-major reshape -> no extra HBM traffic.
    group = 1
    if dim < 128 and 128 % dim == 0 and rows % (128 // dim) == 0:
        group = 128 // dim
    width = group * dim
    packed_rows = rows // group
    x2d = x2d.reshape(packed_rows, width)

    itemsize = jnp.dtype(x.dtype).itemsize
    sublane = {1: 32, 2: 16, 4: 8}.get(itemsize, 8)

    target_bytes, vmem_limit = _vmem_budget()
    row_tile = _choose_row_tile(packed_rows, width * 4, sublane, target_bytes)
    grid_steps = pl.cdiv(packed_rows, row_tile)               # ragged tail OK

    # Fold sqrt(dim) into gamma (tiny) and tile it across the packed groups.
    g_row = jnp.tile(gamma.astype(jnp.float32) * scale, group).reshape(1, width)

    out = pl.pallas_call(
        functools.partial(_rmsnorm_kernel, group=group, dim=dim),
        out_shape=jax.ShapeDtypeStruct((packed_rows, width), x.dtype),
        grid_spec=pltpu.PrefetchScalarGridSpec(
            num_scalar_prefetch=0,
            grid=(grid_steps,),
            in_specs=[
                pl.BlockSpec((row_tile, width), lambda i: (i, 0)),
                pl.BlockSpec((1, width), lambda i: (0, 0)),
            ],
            out_specs=pl.BlockSpec((row_tile, width), lambda i: (i, 0)),
        ),
        compiler_params=pltpu.CompilerParams(
            dimension_semantics=("parallel",),
            vmem_limit_bytes=vmem_limit,
        ),
    )(x2d, g_row)

    return out.reshape(orig_shape)


def rmsnorm_ref(x, gamma):
    dim = x.shape[-1]
    scale = dim ** 0.5
    xf = x.astype(jnp.float32)
    norm = jnp.maximum(jnp.sqrt(jnp.sum(xf * xf, axis=-1, keepdims=True)), _EPS)
    return ((xf / norm) * scale * gamma).astype(x.dtype)


if __name__ == "__main__":
    key = jax.random.PRNGKey(0)
    k1, k2, k3 = jax.random.split(key, 3)

    # Small shape consistent with the module: batch=2, seq=8, hidden=32.
    # dim=32 exercises the lane-dense repack path (group = 4).
    batch, seq, dim = 2, 8, 32
    x = jax.random.normal(k1, (batch, seq, dim), dtype=jnp.float32)
    gamma = jnp.ones((dim,), dtype=jnp.float32)  # nn.Parameter(torch.ones(dim))

    y = jax.block_until_ready(rmsnorm_pallas(x, gamma))
    y_ref = rmsnorm_ref(x, gamma)
    assert y.shape == x.shape
    assert jnp.allclose(y, y_ref, atol=1e-5, rtol=1e-5), "mismatch vs reference"

    # Secondary check: dim >= 128 (group=1) with a row count that does not
    # divide the tile, exercising the ragged last block (no pad / no slice).
    x2 = jax.random.normal(k2, (3, 7, 128), dtype=jnp.float32)
    gamma2 = 1.0 + 0.05 * jax.random.normal(k3, (128,), dtype=jnp.float32)
    y2 = jax.block_until_ready(rmsnorm_pallas(x2, gamma2))
    assert jnp.allclose(y2, rmsnorm_ref(x2, gamma2), atol=1e-5, rtol=1e-5), \
        "mismatch vs reference (ragged case)"

    print("KERNEL_OK")
</pallas_src>

<mosaic_0001>
module attributes {stable_mosaic.version = 11 : i64} {
  func.func @_rmsnorm_kernel(%arg0: i32, %arg1: memref<4x128xf32, #tpu.memory_space<vmem>>, %arg2: memref<1x128xf32, #tpu.memory_space<vmem>>, %arg3: memref<4x128xf32, #tpu.memory_space<vmem>>) attributes {dimension_semantics = [#tpu.dimension_semantics<parallel>], iteration_bounds = array<i64: 1>, scalar_prefetch = 0 : i64, scratch_operands = 0 : i64, tpu.core_type = #tpu.core_type<tc>, window_params = [{transform_indices = @transform_0, window_bounds = array<i64: 4, 128>}, {pipeline_mode = #tpu.pipeline_mode<synchronous>, transform_indices = @transform_1, window_bounds = array<i64: 1, 128>}, {transform_indices = @transform_2, window_bounds = array<i64: 4, 128>}]} {
    %c0 = arith.constant 0 : index
    %c0_0 = arith.constant 0 : index
    %0 = vector.load %arg1[%c0, %c0_0] : memref<4x128xf32, #tpu.memory_space<vmem>>, vector<4x128xf32>
    %c0_1 = arith.constant 0 : index
    %c0_2 = arith.constant 0 : index
    %1 = vector.load %arg2[%c0_1, %c0_2] : memref<1x128xf32, #tpu.memory_space<vmem>>, vector<1x128xf32>
    %2 = vector.shape_cast %0 : vector<4x128xf32> to vector<4x4x32xf32>
    %3 = arith.mulf %2, %2 : vector<4x4x32xf32>
    %cst = arith.constant dense<0.000000e+00> : vector<4x4xf32>
    %4 = vector.multi_reduction <add>, %3, %cst [2] : vector<4x4x32xf32> to vector<4x4xf32>
    %5 = vector.shape_cast %4 : vector<4x4xf32> to vector<4x4x1xf32>
    %cst_3 = arith.constant 1.000000e-24 : f32
    %6 = vector.broadcast %cst_3 : f32 to vector<4x4x1xf32>
    %7 = arith.maximumf %5, %6 : vector<4x4x1xf32>
    %8 = math.rsqrt %7 : vector<4x4x1xf32>
    %9 = vector.shape_cast %8 : vector<4x4x1xf32> to vector<4x4x1xf32>
    %10 = vector.broadcast %9 : vector<4x4x1xf32> to vector<4x4x32xf32>
    %11 = vector.shape_cast %10 : vector<4x4x32xf32> to vector<4x128xf32>
    %12 = arith.mulf %0, %11 : vector<4x128xf32>
    %13 = vector.broadcast %1 : vector<1x128xf32> to vector<4x128xf32>
    %14 = arith.mulf %12, %13 : vector<4x128xf32>
    %c0_4 = arith.constant 0 : index
    %c0_5 = arith.constant 0 : index
    %15 = vector.load %arg3[%c0_4, %c0_5] : memref<4x128xf32, #tpu.memory_space<vmem>>, vector<4x128xf32>
    tpu.vector_store %arg3[%c0_4, %c0_5], %14 {strides = array<i32>} : memref<4x128xf32, #tpu.memory_space<vmem>>, vector<4x128xf32>,
    return
  }
  func.func @transform_0(%arg0: i32) -> (i32, i32) {
    %c0_i32 = arith.constant 0 : i32
    %c0_i32_0 = arith.constant 0 : i32
    return %arg0, %c0_i32 : i32, i32
  }
  func.func @transform_1(%arg0: i32) -> (i32, i32) {
    %c0_i32 = arith.constant 0 : i32
    %c0_i32_0 = arith.constant 0 : i32
    %c0_i32_1 = arith.constant 0 : i32
    return %c0_i32, %c0_i32_0 : i32, i32
  }
  func.func @transform_2(%arg0: i32) -> (i32, i32) {
    %c0_i32 = arith.constant 0 : i32
    %c0_i32_0 = arith.constant 0 : i32
    return %arg0, %c0_i32 : i32, i32
  }
}

</mosaic_0001>

<llo_original>
// kernel: tpu_custom_call.1
$region0: #{tpu_custom_call.1}
  #allocation0 [shape = 'u32[]', space=smem, size = 0x4, offset = 0x4, fixed_abs, tag = 'smem constant byte address 0x4 - core index']
  #allocation1 [shape = 'u32[72,128]{1,0:T(1,128)}', space=vmem, size = 0x9000, scoped, tag = 'internal scratch']
  %s0 = inlined_call_operand.hbm [shape: f32[4,128], index: 0, kind: input, shape index: {}]
  %s1 = inlined_call_operand.hbm [shape: f32[1,128], index: 1, kind: input, shape index: {}]
  %s2 = inlined_call_operand.hbm [shape: f32[4,128], index: 2, kind: output, shape index: {}]
  %s3 = sld [smem:[#allocation0]]
  $region26: #{tpu_custom_call.1} parent=0
    _
  %s5 = ssub.s32 1, %s3
  %s6 = scalar_select 0, %s5, %s3
  $region1: #{tpu_custom_call.1} parent=0
    #allocation2 [shape = 'u8[2048]{0}', space=vmem, size = 0x800, scoped, tag = 'input window, operand 0, single buffered']
    #allocation3 [shape = 's32[1]{0}', space=sflag, size = 0x4, scoped, tag = 'scoped memory for tpu_custom_call.1']
    #allocation4 [shape = 's32[1]{0}', space=sflag, size = 0x4, scoped, tag = 'scoped memory for tpu_custom_call.1']
    #allocation5 [shape = 'u8[512]{0}', space=vmem, size = 0x400, scoped, tag = 'input window, operand 1, single buffered']
    #allocation6 [shape = 's32[1]{0}', space=sflag, size = 0x4, scoped, tag = 'scoped memory for tpu_custom_call.1']
    #allocation7 [shape = 'u8[2048]{0}', space=vmem, size = 0x800, scoped, tag = 'output window, operand 0, single buffered']
    %7 = vsyncpa [#allocation3], 0
    %8 = vsyncpa [#allocation6], 0
    %9 = vsyncpa [#allocation4], 0
    // Predicated region
    $region2: #{tpu_custom_call.1} parent=1 // pred_check
      _
    $region3: #{tpu_custom_call.1} parent=1 // pred_check_branch
      %11 = sbr.rel (0) target = $region5
    $region4: #{tpu_custom_call.1} parent=1 // pred_region
      %13 = vsyncadd [#allocation3], 0
      %s15 = sshll.u32 %s0, 4
      %s16 = int_to_ptr.hbm [resolvable:$true] %s15
      %s17 = sshll.u32 [#allocation2], 4
      %s18 = int_to_ptr.vmem [resolvable:$true] %s17
      %20 = dma.hbm_to_vmem [thread:$0]  %s16, 64, %s18, [#allocation3]
    $region5: #{tpu_custom_call.1} parent=1 // pred_fallthru
      _
    // Predicated region
    $region6: #{tpu_custom_call.1} parent=1 // pred_check
      _
    $region7: #{tpu_custom_call.1} parent=1 // pred_check_branch
      %22 = sbr.rel (0) target = $region9
    $region8: #{tpu_custom_call.1} parent=1 // pred_region
      %24 = vsyncadd [#allocation6], 0
      %s26 = sshll.u32 %s1, 4
      %s27 = int_to_ptr.hbm [resolvable:$true] %s26
      %s28 = sshll.u32 [#allocation5], 4
      %s29 = int_to_ptr.vmem [resolvable:$true] %s28
      %31 = dma.hbm_to_vmem [thread:$0]  %s27, 16, %s29, [#allocation6]
    $region9: #{tpu_custom_call.1} parent=1 // pred_fallthru
      _
    // Predicated region
    $region10: #{tpu_custom_call.1} parent=1 // pred_check
      _
    $region11: #{tpu_custom_call.1} parent=1 // pred_check_branch
      %33 = sbr.rel (0) target = $region13
    $region12: #{tpu_custom_call.1} parent=1 // pred_region
      %35 = dma.done [#allocation3], 64
    $region13: #{tpu_custom_call.1} parent=1 // pred_fallthru
      _
    // Predicated region
    $region14: #{tpu_custom_call.1} parent=1 // pred_check
      _
    $region15: #{tpu_custom_call.1} parent=1 // pred_check_branch
      %37 = sbr.rel (0) target = $region17
    $region16: #{tpu_custom_call.1} parent=1 // pred_region
      %39 = dma.done [#allocation6], 16
    $region17: #{tpu_custom_call.1} parent=1 // pred_fallthru
      _
    %v40 = vld [vmem:[#allocation2] sm:$0xf]
    %v41 = vld [vmem:[#allocation5] sm:$0x1]
    %43 = vrot.lane.b32.xlu0 %v40, 96
    %v44 = vpop.permute.xlu0 %43
    %46 = vrot.lane.b32.xlu0 %v40, 64
    %v47 = vpop.permute.xlu0 %46
    %49 = vrot.lane.b32.xlu0 %v40, 32
    %v50 = vpop.permute.xlu0 %49
    %v52 = vrot.slane %v47, 4
    %vm53 = vcmask 1047556
    %v54 = vsel %vm53, %v52, %v40
    %v56 = vunpack.c.l.s4 1983009808
    %v57 = vunpack.c.0.s8 %v56
    %v58 = vperm.slane %v54, %v57
    %v59 = vrot.slane %v50, 4
    %v60 = vsel %vm53, %v59, %v44
    %v62 = vunpack.c.l.s4 1983009808
    %v63 = vunpack.c.0.s8 %v62
    %v64 = vperm.slane %v60, %v63
    %v65 = vrot.slane %v64, 4
    %v66 = vsel %vm53, %v65, %v58
    %v67 = vrot.slane %v58, 4
    %v68 = vsel %vm53, %v64, %v67
    %v70 = vunpack.c.l.s4 1934713408
    %v71 = vunpack.c.0.s8 %v70
    %v72 = vperm.slane %v66, %v71
    %v74 = vunpack.c.l.s4 1934713408
    %v75 = vunpack.c.0.s8 %v74
    %v76 = vperm.slane %v68, %v75
    %v77 = vrot.slane %v72, 4
    %v78 = vsel %vm53, 0.0, %v77
    %v79 = vrot.slane %v76, 4
    %v80 = vsel %vm53, 0.0, %v79
    %v81 = vmul.f32 %v72, %v72
    %v82 = vmul.f32 %v78, %v78
    %v83 = vmul.f32 %v76, %v76
    %v84 = vmul.f32 %v80, %v80
    %vm85 = vcmask 257024
    %v86 = vsel %vm85, %v81, 0.0
    %87 = vadd.xlane.f32.xlu0 %v86
    %v88 = vpop.xlane.xlu0 %87
    %v89 = vsel %vm85, %v82, 0.0
    %90 = vadd.xlane.f32.xlu0 %v89
    %v91 = vpop.xlane.xlu0 %90
    %v92 = vsel %vm85, %v83, 0.0
    %93 = vadd.xlane.f32.xlu0 %v92
    %v94 = vpop.xlane.xlu0 %93
    %v95 = vsel %vm85, %v84, 0.0
    %96 = vadd.xlane.f32.xlu0 %v95
    %v97 = vpop.xlane.xlu0 %96
    %v98 = vmax.f32 %v88, 1e-24
    %v99 = vmax.f32 %v91, 1e-24
    %v100 = vmax.f32 %v94, 1e-24
    %v101 = vmax.f32 %v97, 1e-24
    %v102 = vrsqrt.pop %v98
    %v103 = vmul.f32 %v102, %v98
    %v104 = vmul.f32 %v103, %v102
    %v105 = vmul.f32 0.5, %v104
    %v106 = vsub.f32 1.5, %v105
    %v107 = vmul.f32 %v102, %v106
    %vm108 = vweird.f32 %v98
    %vm109 = vweird.f32 %v102
    %vm110 = vmor %vm108, %vm109
    %v111 = vsel %vm110, %v102, %v107
    %v112 = vrsqrt.pop %v99
    %v113 = vmul.f32 %v112, %v99
    %v114 = vmul.f32 %v113, %v112
    %v115 = vmul.f32 0.5, %v114
    %v116 = vsub.f32 1.5, %v115
    %v117 = vmul.f32 %v112, %v116
    %vm118 = vweird.f32 %v99
    %vm119 = vweird.f32 %v112
    %vm120 = vmor %vm118, %vm119
    %v121 = vsel %vm120, %v112, %v117
    %v122 = vrsqrt.pop %v100
    %v123 = vmul.f32 %v122, %v100
    %v124 = vmul.f32 %v123, %v122
    %v125 = vmul.f32 0.5, %v124
    %v126 = vsub.f32 1.5, %v125
    %v127 = vmul.f32 %v122, %v126
    %vm128 = vweird.f32 %v100
    %vm129 = vweird.f32 %v122
    %vm130 = vmor %vm128, %vm129
    %v131 = vsel %vm130, %v122, %v127
    %v132 = vrsqrt.pop %v101
    %v133 = vmul.f32 %v132, %v101
    %v134 = vmul.f32 %v133, %v132
    %v135 = vmul.f32 0.5, %v134
    %v136 = vsub.f32 1.5, %v135
    %v137 = vmul.f32 %v132, %v136
    %vm138 = vweird.f32 %v101
    %vm139 = vweird.f32 %v132
    %vm140 = vmor %vm138, %vm139
    %v141 = vsel %vm140, %v132, %v137
    %v142 = vrot.slane %v131, 4
    %v143 = vsel %vm53, %v142, %v111
    %v145 = vunpack.c.l.s4 1983009808
    %v146 = vunpack.c.0.s8 %v145
    %v147 = vperm.slane %v143, %v146
    %v148 = vrot.slane %v141, 4
    %v149 = vsel %vm53, %v148, %v121
    %v151 = vunpack.c.l.s4 1983009808
    %v152 = vunpack.c.0.s8 %v151
    %v153 = vperm.slane %v149, %v152
    %v154 = vrot.slane %v153, 4
    %v155 = vsel %vm53, %v154, %v147
    %v156 = vrot.slane %v147, 4
    %v157 = vsel %vm53, %v153, %v156
    %v159 = vunpack.c.l.s4 1934713408
    %v160 = vunpack.c.0.s8 %v159
    %v161 = vperm.slane %v155, %v160
    %v163 = vunpack.c.l.s4 1934713408
    %v164 = vunpack.c.0.s8 %v163
    %v165 = vperm.slane %v157, %v164
    %v166 = vrot.slane %v161, 4
    %v167 = vsel %vm53, 0.0, %v166
    %v168 = vrot.slane %v165, 4
    %v169 = vsel %vm53, 0.0, %v168
    %171 = vrot.lane.b32.xlu0 %v167, 32
    %v172 = vpop.permute.xlu0 %171
    %175 = vrot.lane.b32.xlu0 %v165, 64
    %v176 = vpop.permute.xlu0 %175
    %179 = vrot.lane.b32.xlu0 %v169, 96
    %v180 = vpop.permute.xlu0 %179
    %vm182 = vcmask 261120
    %v183 = vsel %vm182, %v161, %v172
    %vm184 = vcmask 523264
    %v185 = vsel %vm184, %v183, %v176
    %vm186 = vcmask 785408
    %v187 = vsel %vm186, %v185, %v180
    %v188 = vmul.f32 %v40, %v187
    %v190 = vperm.slane %v41, 0
    %v192 = vmul.f32 %v188, %v190
    %193 = vst [vmem:[#allocation7] sm:$0xf] %v192
    // Predicated region
    $region18: #{tpu_custom_call.1} parent=1 // pred_check
      _
    $region19: #{tpu_custom_call.1} parent=1 // pred_check_branch
      %195 = sbr.rel (0) target = $region21
    $region20: #{tpu_custom_call.1} parent=1 // pred_region
      %197 = vsyncadd [#allocation4], 0
      %s199 = sshll.u32 [#allocation7], 4
      %s200 = int_to_ptr.vmem [resolvable:$true] %s199
      %s201 = sshll.u32 %s2, 4
      %s202 = int_to_ptr.hbm [resolvable:$true] %s201
      %204 = dma.vmem_to_hbm [thread:$0]  %s200, 64, %s202, [#allocation4]
    $region21: #{tpu_custom_call.1} parent=1 // pred_fallthru
      _
    // Predicated region
    $region22: #{tpu_custom_call.1} parent=1 // pred_check
      _
    $region23: #{tpu_custom_call.1} parent=1 // pred_check_branch
      %206 = sbr.rel (0) target = $region25
    $region24: #{tpu_custom_call.1} parent=1 // pred_region
      %208 = dma.done [#allocation4], 64
    $region25: #{tpu_custom_call.1} parent=1 // pred_fallthru
      _
    %209 = vsyncpa [#allocation3], 1
    %210 = vsyncpa [#allocation6], 1
    %211 = vsyncpa [#allocation4], 1

</llo_original>
